<compile_context>
chip_gen: v5e
topology: v5e:2x2
jax: 0.10.0
libtpu: 0.0.40
codegen_flags: <defaults>
</compile_context>

<pallas_src>
import functools
import math

import jax
import jax.numpy as jnp
from jax import lax
from jax.experimental import pallas as pl
from jax.experimental.pallas import tpu as pltpu


def _round_up(x, m):
    return (x + m - 1) // m * m


def _round_down(x, m):
    return (x // m) * m


# ---- path selection / tiling budgets (conservative across v5e/v6e/v7x) ----
_FAST_PATH_TABLE_BYTES = 2 * 1024 * 1024   # VMEM-resident table threshold
_FAST_PATH_MAX_VOCAB = 2048                # bounds the (tb, V) one-hot cost
_VMEM_WORKSET_BYTES = 12 * 1024 * 1024     # budget for (tb, E)-sized buffers
_MAX_TOKENS_PER_CALL = 32 * 1024           # SMEM guard for scalar-prefetch ids
_GATHER_UNROLL = 8                         # DMA issue/wait loop unroll factor


def _pick_token_block(n, emb_size, itemsize, *, extra_vecs):
    """Largest multiple-of-8 token tile whose working set fits the budget.

    extra_vecs ~= number of live (tb, emb)-sized buffers (gather slots +
    pipelined output copies).
    """
    per_token = max(1, extra_vecs * emb_size * itemsize)
    tb = _VMEM_WORKSET_BYTES // per_token
    tb = max(8, min(512, _round_down(tb, 8)))
    tb = min(tb, _round_up(n, 8))          # don't over-pad tiny inputs
    return tb


# ---------------------------------------------------------------------------
# Fast path: VMEM-resident table, one-hot MXU gather.
# ---------------------------------------------------------------------------
def _onehot_embed_kernel(ids_ref, table_ref, out_ref, *, vocab_size, scale):
    """ids_ref: VMEM (tb, 1) int32; table_ref: VMEM (V, E) resident; out (tb, E)."""
    tb = ids_ref.shape[0]
    ids = ids_ref[...]                                           # (tb, 1)
    cols = lax.broadcasted_iota(jnp.int32, (tb, vocab_size), 1)  # (tb, V)
    one_hot = (ids == cols).astype(table_ref.dtype)              # (tb, V)
    acc = jnp.dot(one_hot, table_ref[...],
                  preferred_element_type=jnp.float32)            # (tb, E) f32
    out_ref[...] = (acc * scale).astype(out_ref.dtype)


def _embed_small_table(ids, table, scale):
    n = ids.shape[0]
    vocab_size, emb_size = table.shape
    itemsize = jnp.dtype(table.dtype).itemsize

    # out tile is double-buffered by Pallas; the (tb, V) one-hot also lives in
    # vregs/VMEM -> count ~4 (tb, E)-equivalents, plus an explicit one-hot cap.
    tb = _pick_token_block(n, emb_size, itemsize, extra_vecs=4)
    tb = min(tb, max(8, _round_down((4 * 1024 * 1024) // (4 * vocab_size), 8)))

    n_pad = _round_up(n, tb)
    if n_pad != n:
        ids = jnp.pad(ids, (0, n_pad - n))
    ids2d = ids.reshape(n_pad, 1)

    kernel = functools.partial(_onehot_embed_kernel,
                               vocab_size=vocab_size, scale=scale)
    out = pl.pallas_call(
        kernel,
        out_shape=jax.ShapeDtypeStruct((n_pad, emb_size), table.dtype),
        grid=(n_pad // tb,),
        in_specs=[pl.BlockSpec((tb, 1), lambda i: (i, 0)),
                  # Constant index_map: table is DMA'd once and stays resident.
                  pl.BlockSpec((vocab_size, emb_size), lambda i: (0, 0))],
        out_specs=pl.BlockSpec((tb, emb_size), lambda i: (i, 0)),
        compiler_params=pltpu.CompilerParams(
            # Steps independent -> token axis shards across TCs on v7x.
            dimension_semantics=("parallel",)),
    )(ids2d, table)
    return out[:n]


# ---------------------------------------------------------------------------
# Slow path: HBM-resident table, block-level double-buffered DMA row-gather.
# ---------------------------------------------------------------------------
def _gather_embed_kernel(ids_ref, table_hbm, out_ref, buf, sems, *,
                         token_block, scale):
    """
    ids_ref:   SMEM (n_pad,) int32  -- all chunk token ids (scalar prefetch)
    table_hbm: HBM  (V, E)          -- embedding table, never copied whole
    out_ref:   VMEM (tb, E)         -- output tile (lane-dense when E%128==0)
    buf:       VMEM (2, tb, E)      -- double-buffered gather landing pad
    sems:      DMA   (2,)           -- one shared semaphore per pipeline slot
    """
    i = pl.program_id(0)
    nb = pl.num_programs(0)
    slot = i % 2

    def issue(block_idx, s):
        base = block_idx * token_block

        @pl.loop(0, token_block // _GATHER_UNROLL)
        def _(u):
            t0 = u * _GATHER_UNROLL
            for j in range(_GATHER_UNROLL):      # unrolled: pack id loads +
                t = t0 + j                       # descriptor pushes per bundle
                row = ids_ref[base + t]
                pltpu.make_async_copy(table_hbm.at[pl.ds(row, 1), :],
                                      buf.at[s, pl.ds(t, 1), :],
                                      sems.at[s]).start()

    # Prime the pipeline: the very first step gathers its own block.
    @pl.when(i == 0)
    def _():
        issue(0, 0)

    # Prefetch the next block into the other slot; overlaps with the wait +
    # scale/store below and with Pallas' output writeback of this block.
    @pl.when(i + 1 < nb)
    def _():
        issue(i + 1, 1 - slot)

    # Drain this block's row copies (real src rows re-read from SMEM so the
    # wait descriptors match the issued copies; all share the slot semaphore).
    base = i * token_block

    @pl.loop(0, token_block // _GATHER_UNROLL)
    def _(u):
        t0 = u * _GATHER_UNROLL
        for j in range(_GATHER_UNROLL):
            t = t0 + j
            row = ids_ref[base + t]
            pltpu.make_async_copy(table_hbm.at[pl.ds(row, 1), :],
                                  buf.at[slot, pl.ds(t, 1), :],
                                  sems.at[slot]).wait()

    # Scale in the table dtype (exact for f32; native bf16 VPU on v6e/v7x).
    out_ref[...] = (buf[slot] * scale).astype(out_ref.dtype)


def _embed_gather(ids, table, scale):
    n_total = ids.shape[0]
    vocab_size, emb_size = table.shape
    itemsize = jnp.dtype(table.dtype).itemsize

    # 2 gather slots + ~2 pipelined output copies of the (tb, E) tile.
    tb = _pick_token_block(min(n_total, _MAX_TOKENS_PER_CALL),
                           emb_size, itemsize, extra_vecs=4)

    def one_call(chunk_ids):
        n = chunk_ids.shape[0]
        n_pad = _round_up(n, tb)
        if n_pad != n:
            # Padded tail tokens gather row 0 and are sliced off afterwards.
            chunk_ids = jnp.pad(chunk_ids, (0, n_pad - n))

        kernel = functools.partial(_gather_embed_kernel,
                                   token_block=tb, scale=scale)
        grid_spec = pltpu.PrefetchScalarGridSpec(
            num_scalar_prefetch=1,                          # ids -> SMEM
            grid=(n_pad // tb,),
            in_specs=[pl.BlockSpec(memory_space=pl.ANY)],   # table stays in HBM
            out_specs=pl.BlockSpec((tb, emb_size), lambda i, _ids: (i, 0)),
            scratch_shapes=[
                pltpu.VMEM((2, tb, emb_size), table.dtype),
                pltpu.SemaphoreType.DMA((2,)),
            ],
        )
        out = pl.pallas_call(
            kernel,
            out_shape=jax.ShapeDtypeStruct((n_pad, emb_size), table.dtype),
            grid_spec=grid_spec,
            compiler_params=pltpu.CompilerParams(
                # Cross-step double-buffering carries in-flight DMA state
                # between grid steps, so the token axis must stay arbitrary.
                dimension_semantics=("arbitrary",)),
        )(chunk_ids, table)
        return out[:n]

    if n_total <= _MAX_TOKENS_PER_CALL:
        return one_call(ids)

    # SMEM guard: scalar-prefetched ids pad to next_pow2(4N) bytes, so very
    # long sequences are processed in fixed-size chunks.
    outs = []
    for start in range(0, n_total, _MAX_TOKENS_PER_CALL):
        stop = min(start + _MAX_TOKENS_PER_CALL, n_total)
        outs.append(one_call(ids[start:stop]))
    return jnp.concatenate(outs, axis=0)


# ---------------------------------------------------------------------------
# Public wrapper: TokenEmbedding.forward
# ---------------------------------------------------------------------------
def token_embedding(tokens, table):
    """tokens: integer array (e.g. (B, S)); table: (vocab, emb).

    Returns table[tokens] * sqrt(emb), matching
    nn.Embedding()(tokens.long()) * math.sqrt(emb_size).
    """
    vocab_size, emb_size = table.shape
    scale = math.sqrt(emb_size)

    n = math.prod(tokens.shape)
    ids = tokens.reshape(n).astype(jnp.int32)
    # PyTorch's nn.Embedding raises on out-of-range ids; a DMA gather would
    # silently OOB-read instead, so clamp defensively.
    # TODO(synk): surface an explicit error for out-of-range (incl. -1) ids.
    ids = jnp.clip(ids, 0, vocab_size - 1)

    table_bytes = vocab_size * emb_size * jnp.dtype(table.dtype).itemsize
    if table_bytes <= _FAST_PATH_TABLE_BYTES and vocab_size <= _FAST_PATH_MAX_VOCAB:
        out = _embed_small_table(ids, table, scale)
    else:
        out = _embed_gather(ids, table, scale)

    return out.reshape(*tokens.shape, emb_size)


def reference_token_embedding(tokens, table):
    emb_size = table.shape[1]
    return table[tokens.astype(jnp.int32)] * math.sqrt(emb_size)


if __name__ == "__main__":
    key = jax.random.PRNGKey(0)
    k_tok, k_emb = jax.random.split(key)

    # --- small config (matches the PyTorch module at demo sizes): fast path ---
    vocab_size, emb_size = 64, 128
    batch, seq = 2, 8

    table = jax.random.normal(k_emb, (vocab_size, emb_size), dtype=jnp.float32)
    tokens = jax.random.randint(k_tok, (batch, seq), 0, vocab_size,
                                dtype=jnp.int32)

    out = jax.block_until_ready(token_embedding(tokens, table))
    ref = reference_token_embedding(tokens, table)
    assert out.shape == (batch, seq, emb_size)
    assert jnp.allclose(out, ref, atol=1e-5, rtol=1e-5)

    # --- larger-vocab config: exercises the HBM DMA-gather path with >= 2
    #     grid steps so the block-level double-buffering is covered. ---
    vocab_big, emb_big = 4096, 256
    table_big = jax.random.normal(jax.random.PRNGKey(1),
                                  (vocab_big, emb_big), dtype=jnp.float32)
    tokens_big = jax.random.randint(jax.random.PRNGKey(2), (8, 128),
                                    0, vocab_big, dtype=jnp.int32)
    out_big = jax.block_until_ready(token_embedding(tokens_big, table_big))
    ref_big = reference_token_embedding(tokens_big, table_big)
    assert out_big.shape == (8, 128, emb_big)
    assert jnp.allclose(out_big, ref_big, atol=1e-5, rtol=1e-5)

    print("KERNEL_OK")
</pallas_src>

<mosaic_0001>
module attributes {stable_mosaic.version = 11 : i64} {
  func.func @_onehot_embed_kernel(%arg0: i32, %arg1: memref<16x1xi32, #tpu.memory_space<vmem>>, %arg2: memref<64x128xf32, #tpu.memory_space<vmem>>, %arg3: memref<16x128xf32, #tpu.memory_space<vmem>>) attributes {dimension_semantics = [#tpu.dimension_semantics<parallel>], iteration_bounds = array<i64: 1>, scalar_prefetch = 0 : i64, scratch_operands = 0 : i64, tpu.core_type = #tpu.core_type<tc>, window_params = [{transform_indices = @transform_0, window_bounds = array<i64: 16, 1>}, {pipeline_mode = #tpu.pipeline_mode<synchronous>, transform_indices = @transform_1, window_bounds = array<i64: 64, 128>}, {transform_indices = @transform_2, window_bounds = array<i64: 16, 128>}]} {
    %c0 = arith.constant 0 : index
    %c0_0 = arith.constant 0 : index
    %0 = vector.load %arg1[%c0, %c0_0] : memref<16x1xi32, #tpu.memory_space<vmem>>, vector<16x1xi32>
    %1 = tpu.iota {dimensions = array<i32: 1>} : vector<16x64xi32>
    %2 = vector.broadcast %0 : vector<16x1xi32> to vector<16x64xi32>
    %3 = arith.cmpi eq, %2, %1 : vector<16x64xi32>
    %4 = arith.extui %3 : vector<16x64xi1> to vector<16x64xi32>
    %5 = arith.sitofp %4 : vector<16x64xi32> to vector<16x64xf32>
    %c0_1 = arith.constant 0 : index
    %c0_2 = arith.constant 0 : index
    %6 = vector.load %arg2[%c0_1, %c0_2] : memref<64x128xf32, #tpu.memory_space<vmem>>, vector<64x128xf32>
    %cst = arith.constant dense<0.000000e+00> : vector<16x128xf32>
    %7 = tpu.matmul %5, %6, %cst {dimension_numbers = #tpu.dot_dimension_numbers<[1], [0], [0], [1], [0, 0, 1, 1], [], []>} : vector<16x64xf32>, vector<64x128xf32>, vector<16x128xf32> -> vector<16x128xf32>
    %cst_3 = arith.constant 11.3137083 : f32
    %8 = vector.broadcast %cst_3 : f32 to vector<16x128xf32>
    %9 = arith.mulf %7, %8 : vector<16x128xf32>
    %c0_4 = arith.constant 0 : index
    %c0_5 = arith.constant 0 : index
    %10 = vector.load %arg3[%c0_4, %c0_5] : memref<16x128xf32, #tpu.memory_space<vmem>>, vector<16x128xf32>
    tpu.vector_store %arg3[%c0_4, %c0_5], %9 {strides = array<i32>} : memref<16x128xf32, #tpu.memory_space<vmem>>, vector<16x128xf32>,
    return
  }
  func.func @transform_0(%arg0: i32) -> (i32, i32) {
    %c0_i32 = arith.constant 0 : i32
    %c0_i32_0 = arith.constant 0 : i32
    return %arg0, %c0_i32 : i32, i32
  }
  func.func @transform_1(%arg0: i32) -> (i32, i32) {
    %c0_i32 = arith.constant 0 : i32
    %c0_i32_0 = arith.constant 0 : i32
    %c0_i32_1 = arith.constant 0 : i32
    return %c0_i32, %c0_i32_0 : i32, i32
  }
  func.func @transform_2(%arg0: i32) -> (i32, i32) {
    %c0_i32 = arith.constant 0 : i32
    %c0_i32_0 = arith.constant 0 : i32
    return %arg0, %c0_i32 : i32, i32
  }
}

</mosaic_0001>

<llo_original>
// kernel: tpu_custom_call.1
$region0: #{tpu_custom_call.1}
  #allocation0 [shape = 'u32[]', space=smem, size = 0x4, offset = 0x4, fixed_abs, tag = 'smem constant byte address 0x4 - core index']
  #allocation1 [shape = 'u32[72,128]{1,0:T(1,128)}', space=vmem, size = 0x9000, scoped, tag = 'internal scratch']
  %s0 = inlined_call_operand.vmem [shape: s32[16,1], index: 0, kind: input, shape index: {}]
  %s1 = inlined_call_operand.hbm [shape: f32[64,128], index: 1, kind: input, shape index: {}]
  %s2 = inlined_call_operand.hbm [shape: f32[16,128], index: 2, kind: output, shape index: {}]
  %s3 = sld [smem:[#allocation0]]
  $region22: #{tpu_custom_call.1} parent=0
    _
  %s5 = ssub.s32 1, %s3
  %s6 = scalar_select 0, %s5, %s3
  $region1: #{tpu_custom_call.1} parent=0
    #allocation2 [shape = 'u8[32768]{0}', space=vmem, size = 0x8000, scoped, tag = 'input window, operand 1, single buffered']
    #allocation3 [shape = 's32[1]{0}', space=sflag, size = 0x4, scoped, tag = 'scoped memory for tpu_custom_call.1']
    #allocation4 [shape = 's32[1]{0}', space=sflag, size = 0x4, scoped, tag = 'scoped memory for tpu_custom_call.1']
    #allocation5 [shape = 'u8[8192]{0}', space=vmem, size = 0x2000, scoped, tag = 'output window, operand 0, single buffered']
    %7 = vsyncpa [#allocation3], 0
    %8 = vsyncpa [#allocation4], 0
    // Predicated region
    $region2: #{tpu_custom_call.1} parent=1 // pred_check
      _
    $region3: #{tpu_custom_call.1} parent=1 // pred_check_branch
      %10 = sbr.rel (0) target = $region5
    $region4: #{tpu_custom_call.1} parent=1 // pred_region
      _
    $region5: #{tpu_custom_call.1} parent=1 // pred_fallthru
      _
    // Predicated region
    $region6: #{tpu_custom_call.1} parent=1 // pred_check
      _
    $region7: #{tpu_custom_call.1} parent=1 // pred_check_branch
      %12 = sbr.rel (0) target = $region9
    $region8: #{tpu_custom_call.1} parent=1 // pred_region
      %14 = vsyncadd [#allocation3], 0
      %s15 = sshll.u32 %s1, 4
      %s16 = int_to_ptr.hbm [resolvable:$true] %s15
      %s17 = sshll.u32 [#allocation2], 4
      %s18 = int_to_ptr.vmem [resolvable:$true] %s17
      %23 = dma.hbm_to_vmem [thread:$0]  %s16, 1024, %s18, [#allocation3], 128, 128, 8
    $region9: #{tpu_custom_call.1} parent=1 // pred_fallthru
      _
    // Predicated region
    $region10: #{tpu_custom_call.1} parent=1 // pred_check
      _
    $region11: #{tpu_custom_call.1} parent=1 // pred_check_branch
      %25 = sbr.rel (0) target = $region13
    $region12: #{tpu_custom_call.1} parent=1 // pred_region
      %27 = dma.done [#allocation3], 1024
    $region13: #{tpu_custom_call.1} parent=1 // pred_fallthru
      _
    %v28 = vld [vmem:[%s0] sm:$0xff]
    %v29 = vld [vmem:[%s0 + $0x8] sm:$0xff]
    %v30 = vlaneseq
    %v31 = vand.u32 %v30, 127
    %32 = vset.pattern.permute.xlu0 0
    %33 = vperm.xlu0 %32, %v28
    %v34 = vpop.permute.xlu0 %33
    %35 = vset.pattern.permute.xlu0 0
    %36 = vperm.xlu0 %35, %v29
    %v37 = vpop.permute.xlu0 %36
    %vm38 = vcmp.eq.s32.totalorder %v34, %v31
    %vm39 = vcmp.eq.s32.totalorder %v37, %v31
    %v40 = vsel %vm38, 1, 0
    %v41 = vsel %vm39, 1, 0
    %v42 = vcvt.s32.f32 %v40
    %v43 = vcvt.s32.f32 %v41
    %v44 = vld [vmem:[#allocation2] sm:$0xff]
    %v45 = vld [vmem:[#allocation2 + $0x8] sm:$0xff]
    %v46 = vld [vmem:[#allocation2 + $0x10] sm:$0xff]
    %v47 = vld [vmem:[#allocation2 + $0x18] sm:$0xff]
    %v48 = vld [vmem:[#allocation2 + $0x20] sm:$0xff]
    %v49 = vld [vmem:[#allocation2 + $0x28] sm:$0xff]
    %v50 = vld [vmem:[#allocation2 + $0x30] sm:$0xff]
    %v51 = vld [vmem:[#allocation2 + $0x38] sm:$0xff]
    %vm52 = vcmask 523264
    %v54 = vsel %vm52, %v42, 0
    %v57 = vsel %vm52, %v43, 0
    %59 = vmatpush.msra.mxu0 0.0
    %60 = vmatpush.msra.mxu0 0.0
    %61 = vmatpush.msra.mxu0 0.0
    %62 = vmatpush.msra.mxu0 0.0
    %63 = vmatpush.msra.mxu0 0.0
    %64 = vmatpush.msra.mxu0 0.0
    %65 = vmatpush.msra.mxu0 0.0
    %66 = vmatpush.msra.mxu0 0.0
    %67 = vmatpush.msra.mxu0 %v51
    %68 = vmatpush.msra.mxu0 %v50
    %69 = vmatpush.msra.mxu0 %v49
    %70 = vmatpush.msra.mxu0 %v48
    %71 = vmatpush.msra.mxu0 %v47
    %72 = vmatpush.msra.mxu0 %v46
    %73 = vmatpush.msra.mxu0 %v45
    %74 = vmatpush.msra.mxu0 %v44
    %75 = vmatmul.f32.gmra.mxu0 %v54
    %v76 = vpop.f32.mrf.mxu0
    %v77 = vadd.f32 0.0, %v76
    %78 = vmatmul.f32.gmra.mxu0 %v57
    %v79 = vpop.f32.mrf.mxu0
    %v80 = vadd.f32 0.0, %v79
    %81 = vdwg.mxu0
    %v82 = vmul.f32 %v77, 11.313708
    %v83 = vmul.f32 %v80, 11.313708
    %84 = vst [vmem:[#allocation5] sm:$0xff] %v82
    %85 = vst [vmem:[#allocation5 + $0x8] sm:$0xff] %v83
    // Predicated region
    $region14: #{tpu_custom_call.1} parent=1 // pred_check
      _
    $region15: #{tpu_custom_call.1} parent=1 // pred_check_branch
      %87 = sbr.rel (0) target = $region17
    $region16: #{tpu_custom_call.1} parent=1 // pred_region
      %89 = vsyncadd [#allocation4], 0
      %s90 = sshll.u32 [#allocation5], 4
      %s91 = int_to_ptr.vmem [resolvable:$true] %s90
      %s92 = sshll.u32 %s2, 4
      %s93 = int_to_ptr.hbm [resolvable:$true] %s92
      %98 = dma.vmem_to_hbm [thread:$0]  %s91, 256, %s93, [#allocation4], 128, 128, 8
    $region17: #{tpu_custom_call.1} parent=1 // pred_fallthru
      _
    // Predicated region
    $region18: #{tpu_custom_call.1} parent=1 // pred_check
      _
    $region19: #{tpu_custom_call.1} parent=1 // pred_check_branch
      %100 = sbr.rel (0) target = $region21
    $region20: #{tpu_custom_call.1} parent=1 // pred_region
      %102 = dma.done [#allocation4], 256
    $region21: #{tpu_custom_call.1} parent=1 // pred_fallthru
      _
    %103 = vsyncpa [#allocation3], 1
    %104 = vsyncpa [#allocation4], 1

</llo_original>
